<compile_context>
chip_gen: v7x
topology: tpu7x:2x2x1
jax: 0.10.0
libtpu: 0.0.40
codegen_flags: <defaults>
</compile_context>

<pallas_src>
import jax
import jax.numpy as jnp
from jax.experimental import pallas as pl
from jax.experimental.pallas import tpu as pltpu  # noqa: F401  (TPU backend; params not needed at this size)


def _to_copy_view_kernel(x_ref, y_ref, o_ref):
    # x_ref: (B, 1, D) f32   -- un-broadcast x
    # y_ref, o_ref: (B, S, D) f32
    # bf16 round-trip on the small x only (never on y), matching PyTorch's
    # bf16 + f32 -> f32 type promotion; casting before the broadcast is
    # bit-identical to casting after it.
    x_rt = x_ref[...].astype(jnp.bfloat16).astype(jnp.float32)   # (B, 1, D)
    # Broadcast along S (second-minor / sublane axis) happens inside the add.
    o_ref[...] = x_rt + jnp.abs(y_ref[...])


def to_copy_view_forward(x, y, target_shape):
    """Pallas implementation of ToCopyViewModule.forward."""
    # aten.view is pure metadata -> plain JAX reshape in the wrapper.
    x_view = jnp.reshape(x, target_shape)          # (16, 1, 32)
    B, one, D = x_view.shape
    Bb, S, Dd = y.shape                            # (16, 32, 32)
    assert B == Bb and D == Dd and one == 1

    # abs + add on B*S*D elements; cast flops negligible. Bytes: x (2 KiB) +
    # y in (64 KiB) + out (64 KiB).
    cost = pl.CostEstimate(
        flops=2 * B * S * D,
        transcendentals=0,
        bytes_accessed=(B * one * D + 2 * B * S * D) * 4,
    )

    return pl.pallas_call(
        _to_copy_view_kernel,
        out_shape=jax.ShapeDtypeStruct((B, S, D), jnp.float32),
        in_specs=[
            pl.BlockSpec((B, one, D), lambda: (0, 0, 0)),   # x, un-broadcast (~2 KiB)
            pl.BlockSpec((B, S, D), lambda: (0, 0, 0)),     # y, full array
        ],
        out_specs=pl.BlockSpec((B, S, D), lambda: (0, 0, 0)),
        cost_estimate=cost,
    )(x_view, y)


if __name__ == "__main__":
    key = jax.random.PRNGKey(0)
    kx, ky = jax.random.split(key)

    x = jax.random.normal(kx, (16, 1, 32), dtype=jnp.float32)
    y = jax.random.normal(ky, (16, 32, 32), dtype=jnp.float32)
    target_shape = (16, 1, 32)

    out = to_copy_view_forward(x, y, target_shape)
    out = jax.block_until_ready(out)

    # Reference check (plain JAX, same semantics as the PyTorch module).
    ref = (
        jnp.reshape(x, target_shape).astype(jnp.bfloat16).astype(jnp.float32)
        + jnp.abs(y)
    )
    assert out.shape == (16, 32, 32)
    assert out.dtype == jnp.float32
    assert jnp.allclose(out, ref, atol=1e-6, rtol=1e-6)

    print("KERNEL_OK")
</pallas_src>

<mosaic_0001>
module attributes {stable_mosaic.version = 11 : i64} {
  func.func @_to_copy_view_kernel(%arg0: memref<16x1x32xf32, #tpu.memory_space<vmem>>, %arg1: memref<16x32x32xf32, #tpu.memory_space<vmem>>, %arg2: memref<16x32x32xf32, #tpu.memory_space<vmem>>) attributes {dimension_semantics = [], scalar_prefetch = 0 : i64, scratch_operands = 0 : i64, tpu.core_type = #tpu.core_type<tc>} {
    %c0 = arith.constant 0 : index
    %c0_0 = arith.constant 0 : index
    %c0_1 = arith.constant 0 : index
    %0 = vector.load %arg0[%c0, %c0_0, %c0_1] : memref<16x1x32xf32, #tpu.memory_space<vmem>>, vector<16x1x32xf32>
    %1 = arith.truncf %0 : vector<16x1x32xf32> to vector<16x1x32xbf16>
    %2 = arith.extf %1 : vector<16x1x32xbf16> to vector<16x1x32xf32>
    %c0_2 = arith.constant 0 : index
    %c0_3 = arith.constant 0 : index
    %c0_4 = arith.constant 0 : index
    %3 = vector.load %arg1[%c0_2, %c0_3, %c0_4] : memref<16x32x32xf32, #tpu.memory_space<vmem>>, vector<16x32x32xf32>
    %4 = math.absf %3 : vector<16x32x32xf32>
    %5 = vector.broadcast %2 : vector<16x1x32xf32> to vector<16x32x32xf32>
    %6 = arith.addf %5, %4 : vector<16x32x32xf32>
    %c0_5 = arith.constant 0 : index
    %c0_6 = arith.constant 0 : index
    %c0_7 = arith.constant 0 : index
    %7 = vector.load %arg2[%c0_5, %c0_6, %c0_7] : memref<16x32x32xf32, #tpu.memory_space<vmem>>, vector<16x32x32xf32>
    tpu.vector_store %arg2[%c0_5, %c0_6, %c0_7], %6 {strides = array<i32>} : memref<16x32x32xf32, #tpu.memory_space<vmem>>, vector<16x32x32xf32>,
    return
  }
}

</mosaic_0001>

<llo_original>
// kernel: tpu_custom_call.1
$region0: #{tpu_custom_call.1}
  #allocation0 [shape = 'u32[]', space=smem, size = 0x4, offset = 0x4, fixed_abs, tag = 'smem constant byte address 0x4 - core index']
  #allocation1 [shape = 'u32[144,128]{1,0:T(1,128)}', space=vmem, size = 0x12000, scoped, tag = 'internal scratch']
  %s0 = inlined_call_operand.hbm [shape: f32[16,1,32], index: 0, kind: input, shape index: {}]
  %s1 = inlined_call_operand.hbm [shape: f32[16,32,32], index: 1, kind: input, shape index: {}]
  %s2 = inlined_call_operand.hbm [shape: f32[16,32,32], index: 2, kind: output, shape index: {}]
  %s3 = sld [smem:[#allocation0]]
  $region26: #{tpu_custom_call.1} parent=0
    _
  %s5 = ssub.s32 1, %s3
  %s6 = scalar_select 0, %s5, %s3
  $region1: #{tpu_custom_call.1} parent=0
    #allocation2 [shape = 'u8[8192]{0}', space=vmem, size = 0x2000, scoped, tag = 'input window, operand 0, single buffered']
    #allocation3 [shape = 's32[1]{0}', space=sflag, size = 0x4, scoped, tag = 'scoped memory for tpu_custom_call.1']
    #allocation4 [shape = 's32[1]{0}', space=sflag, size = 0x4, scoped, tag = 'scoped memory for tpu_custom_call.1']
    #allocation5 [shape = 'u8[262144]{0}', space=vmem, size = 0x40000, scoped, tag = 'input window, operand 1, single buffered']
    #allocation6 [shape = 's32[1]{0}', space=sflag, size = 0x4, scoped, tag = 'scoped memory for tpu_custom_call.1']
    #allocation7 [shape = 'u8[262144]{0}', space=vmem, size = 0x40000, scoped, tag = 'output window, operand 0, single buffered']
    %7 = vsyncpa [#allocation3], 0
    %8 = vsyncpa [#allocation6], 0
    %9 = vsyncpa [#allocation4], 0
    // Predicated region
    $region2: #{tpu_custom_call.1} parent=1 // pred_check
      _
    $region3: #{tpu_custom_call.1} parent=1 // pred_check_branch
      %11 = sbr.rel (0) target = $region5
    $region4: #{tpu_custom_call.1} parent=1 // pred_region
      %s13 = ssub.s32 256, 256
      %14 = vsyncadd [#allocation3], %s13
      %s15 = sshll.u32 [#allocation2], 4
      %s16 = int_to_ptr.vmem [resolvable:$true] %s15
      %21 = dma.hbm_to_vmem [thread:$0]  %s0, 256, %s16, [#allocation3], 16, 16, 1
    $region5: #{tpu_custom_call.1} parent=1 // pred_fallthru
      _
    // Predicated region
    $region6: #{tpu_custom_call.1} parent=1 // pred_check
      _
    $region7: #{tpu_custom_call.1} parent=1 // pred_check_branch
      %23 = sbr.rel (0) target = $region9
    $region8: #{tpu_custom_call.1} parent=1 // pred_region
      %s25 = ssub.s32 8192, 8192
      %26 = vsyncadd [#allocation6], %s25
      %s27 = sshll.u32 [#allocation5], 4
      %s28 = int_to_ptr.vmem [resolvable:$true] %s27
      %33 = dma.hbm_to_vmem [thread:$0]  %s1, 8192, %s28, [#allocation6], 128, 128, 8
    $region9: #{tpu_custom_call.1} parent=1 // pred_fallthru
      _
    // Predicated region
    $region10: #{tpu_custom_call.1} parent=1 // pred_check
      _
    $region11: #{tpu_custom_call.1} parent=1 // pred_check_branch
      %35 = sbr.rel (0) target = $region13
    $region12: #{tpu_custom_call.1} parent=1 // pred_region
      %36 = dma.done [#allocation3], 256
    $region13: #{tpu_custom_call.1} parent=1 // pred_fallthru
      _
    // Predicated region
    $region14: #{tpu_custom_call.1} parent=1 // pred_check
      _
    $region15: #{tpu_custom_call.1} parent=1 // pred_check_branch
      %38 = sbr.rel (0) target = $region17
    $region16: #{tpu_custom_call.1} parent=1 // pred_region
      %39 = dma.done [#allocation6], 8192
    $region17: #{tpu_custom_call.1} parent=1 // pred_fallthru
      _
    %v40 = vld [vmem:[#allocation2] sm:$0x1]
    %v41 = vld [vmem:[#allocation2 + $0x1] sm:$0x1]
    %v42 = vld [vmem:[#allocation2 + $0x2] sm:$0x1]
    %v43 = vld [vmem:[#allocation2 + $0x3] sm:$0x1]
    %v44 = vld [vmem:[#allocation2 + $0x4] sm:$0x1]
    %v45 = vld [vmem:[#allocation2 + $0x5] sm:$0x1]
    %v46 = vld [vmem:[#allocation2 + $0x6] sm:$0x1]
    %v47 = vld [vmem:[#allocation2 + $0x7] sm:$0x1]
    %v48 = vld [vmem:[#allocation2 + $0x8] sm:$0x1]
    %v49 = vld [vmem:[#allocation2 + $0x9] sm:$0x1]
    %v50 = vld [vmem:[#allocation2 + $0xa] sm:$0x1]
    %v51 = vld [vmem:[#allocation2 + $0xb] sm:$0x1]
    %v52 = vld [vmem:[#allocation2 + $0xc] sm:$0x1]
    %v53 = vld [vmem:[#allocation2 + $0xd] sm:$0x1]
    %v54 = vld [vmem:[#allocation2 + $0xe] sm:$0x1]
    %v55 = vld [vmem:[#allocation2 + $0xf] sm:$0x1]
    %v56 = vpack.c.bf16 %v40, %v40
    %v57 = vpack.c.bf16 %v41, %v41
    %v58 = vpack.c.bf16 %v42, %v42
    %v59 = vpack.c.bf16 %v43, %v43
    %v60 = vpack.c.bf16 %v44, %v44
    %v61 = vpack.c.bf16 %v45, %v45
    %v62 = vpack.c.bf16 %v46, %v46
    %v63 = vpack.c.bf16 %v47, %v47
    %v64 = vpack.c.bf16 %v48, %v48
    %v65 = vpack.c.bf16 %v49, %v49
    %v66 = vpack.c.bf16 %v50, %v50
    %v67 = vpack.c.bf16 %v51, %v51
    %v68 = vpack.c.bf16 %v52, %v52
    %v69 = vpack.c.bf16 %v53, %v53
    %v70 = vpack.c.bf16 %v54, %v54
    %v71 = vpack.c.bf16 %v55, %v55
    %v72 = vunpack.c.l.bf16 %v56
    %v73 = vunpack.c.l.bf16 %v57
    %v74 = vunpack.c.l.bf16 %v58
    %v75 = vunpack.c.l.bf16 %v59
    %v76 = vunpack.c.l.bf16 %v60
    %v77 = vunpack.c.l.bf16 %v61
    %v78 = vunpack.c.l.bf16 %v62
    %v79 = vunpack.c.l.bf16 %v63
    %v80 = vunpack.c.l.bf16 %v64
    %v81 = vunpack.c.l.bf16 %v65
    %v82 = vunpack.c.l.bf16 %v66
    %v83 = vunpack.c.l.bf16 %v67
    %v84 = vunpack.c.l.bf16 %v68
    %v85 = vunpack.c.l.bf16 %v69
    %v86 = vunpack.c.l.bf16 %v70
    %v87 = vunpack.c.l.bf16 %v71
    %v88 = vld [vmem:[#allocation5] sm:$0xff]
    %v89 = vld [vmem:[#allocation5 + $0x8] sm:$0xff]
    %v90 = vld [vmem:[#allocation5 + $0x10] sm:$0xff]
    %v91 = vld [vmem:[#allocation5 + $0x18] sm:$0xff]
    %v92 = vld [vmem:[#allocation5 + $0x20] sm:$0xff]
    %v93 = vld [vmem:[#allocation5 + $0x28] sm:$0xff]
    %v94 = vld [vmem:[#allocation5 + $0x30] sm:$0xff]
    %v95 = vld [vmem:[#allocation5 + $0x38] sm:$0xff]
    %v96 = vld [vmem:[#allocation5 + $0x40] sm:$0xff]
    %v97 = vld [vmem:[#allocation5 + $0x48] sm:$0xff]
    %v98 = vld [vmem:[#allocation5 + $0x50] sm:$0xff]
    %v99 = vld [vmem:[#allocation5 + $0x58] sm:$0xff]
    %v100 = vld [vmem:[#allocation5 + $0x60] sm:$0xff]
    %v101 = vld [vmem:[#allocation5 + $0x68] sm:$0xff]
    %v102 = vld [vmem:[#allocation5 + $0x70] sm:$0xff]
    %v103 = vld [vmem:[#allocation5 + $0x78] sm:$0xff]
    %v104 = vld [vmem:[#allocation5 + $0x80] sm:$0xff]
    %v105 = vld [vmem:[#allocation5 + $0x88] sm:$0xff]
    %v106 = vld [vmem:[#allocation5 + $0x90] sm:$0xff]
    %v107 = vld [vmem:[#allocation5 + $0x98] sm:$0xff]
    %v108 = vld [vmem:[#allocation5 + $0xa0] sm:$0xff]
    %v109 = vld [vmem:[#allocation5 + $0xa8] sm:$0xff]
    %v110 = vld [vmem:[#allocation5 + $0xb0] sm:$0xff]
    %v111 = vld [vmem:[#allocation5 + $0xb8] sm:$0xff]
    %v112 = vld [vmem:[#allocation5 + $0xc0] sm:$0xff]
    %v113 = vld [vmem:[#allocation5 + $0xc8] sm:$0xff]
    %v114 = vld [vmem:[#allocation5 + $0xd0] sm:$0xff]
    %v115 = vld [vmem:[#allocation5 + $0xd8] sm:$0xff]
    %v116 = vld [vmem:[#allocation5 + $0xe0] sm:$0xff]
    %v117 = vld [vmem:[#allocation5 + $0xe8] sm:$0xff]
    %v118 = vld [vmem:[#allocation5 + $0xf0] sm:$0xff]
    %v119 = vld [vmem:[#allocation5 + $0xf8] sm:$0xff]
    %v120 = vld [vmem:[#allocation5 + $0x100] sm:$0xff]
    %v121 = vld [vmem:[#allocation5 + $0x108] sm:$0xff]
    %v122 = vld [vmem:[#allocation5 + $0x110] sm:$0xff]
    %v123 = vld [vmem:[#allocation5 + $0x118] sm:$0xff]
    %v124 = vld [vmem:[#allocation5 + $0x120] sm:$0xff]
    %v125 = vld [vmem:[#allocation5 + $0x128] sm:$0xff]
    %v126 = vld [vmem:[#allocation5 + $0x130] sm:$0xff]
    %v127 = vld [vmem:[#allocation5 + $0x138] sm:$0xff]
    %v128 = vld [vmem:[#allocation5 + $0x140] sm:$0xff]
    %v129 = vld [vmem:[#allocation5 + $0x148] sm:$0xff]
    %v130 = vld [vmem:[#allocation5 + $0x150] sm:$0xff]
    %v131 = vld [vmem:[#allocation5 + $0x158] sm:$0xff]
    %v132 = vld [vmem:[#allocation5 + $0x160] sm:$0xff]
    %v133 = vld [vmem:[#allocation5 + $0x168] sm:$0xff]
    %v134 = vld [vmem:[#allocation5 + $0x170] sm:$0xff]
    %v135 = vld [vmem:[#allocation5 + $0x178] sm:$0xff]
    %v136 = vld [vmem:[#allocation5 + $0x180] sm:$0xff]
    %v137 = vld [vmem:[#allocation5 + $0x188] sm:$0xff]
    %v138 = vld [vmem:[#allocation5 + $0x190] sm:$0xff]
    %v139 = vld [vmem:[#allocation5 + $0x198] sm:$0xff]
    %v140 = vld [vmem:[#allocation5 + $0x1a0] sm:$0xff]
    %v141 = vld [vmem:[#allocation5 + $0x1a8] sm:$0xff]
    %v142 = vld [vmem:[#allocation5 + $0x1b0] sm:$0xff]
    %v143 = vld [vmem:[#allocation5 + $0x1b8] sm:$0xff]
    %v144 = vld [vmem:[#allocation5 + $0x1c0] sm:$0xff]
    %v145 = vld [vmem:[#allocation5 + $0x1c8] sm:$0xff]
    %v146 = vld [vmem:[#allocation5 + $0x1d0] sm:$0xff]
    %v147 = vld [vmem:[#allocation5 + $0x1d8] sm:$0xff]
    %v148 = vld [vmem:[#allocation5 + $0x1e0] sm:$0xff]
    %v149 = vld [vmem:[#allocation5 + $0x1e8] sm:$0xff]
    %v150 = vld [vmem:[#allocation5 + $0x1f0] sm:$0xff]
    %v151 = vld [vmem:[#allocation5 + $0x1f8] sm:$0xff]
    %v152 = vand.u32 2147483647, %v88
    %v153 = vand.u32 2147483647, %v89
    %v154 = vand.u32 2147483647, %v90
    %v155 = vand.u32 2147483647, %v91
    %v156 = vand.u32 2147483647, %v92
    %v157 = vand.u32 2147483647, %v93
    %v158 = vand.u32 2147483647, %v94
    %v159 = vand.u32 2147483647, %v95
    %v160 = vand.u32 2147483647, %v96
    %v161 = vand.u32 2147483647, %v97
    %v162 = vand.u32 2147483647, %v98
    %v163 = vand.u32 2147483647, %v99
    %v164 = vand.u32 2147483647, %v100
    %v165 = vand.u32 2147483647, %v101
    %v166 = vand.u32 2147483647, %v102
    %v167 = vand.u32 2147483647, %v103
    %v168 = vand.u32 2147483647, %v104
    %v169 = vand.u32 2147483647, %v105
    %v170 = vand.u32 2147483647, %v106
    %v171 = vand.u32 2147483647, %v107
    %v172 = vand.u32 2147483647, %v108
    %v173 = vand.u32 2147483647, %v109
    %v174 = vand.u32 2147483647, %v110
    %v175 = vand.u32 2147483647, %v111
    %v176 = vand.u32 2147483647, %v112
    %v177 = vand.u32 2147483647, %v113
    %v178 = vand.u32 2147483647, %v114
    %v179 = vand.u32 2147483647, %v115
    %v180 = vand.u32 2147483647, %v116
    %v181 = vand.u32 2147483647, %v117
    %v182 = vand.u32 2147483647, %v118
    %v183 = vand.u32 2147483647, %v119
    %v184 = vand.u32 2147483647, %v120
    %v185 = vand.u32 2147483647, %v121
    %v186 = vand.u32 2147483647, %v122
    %v187 = vand.u32 2147483647, %v123
    %v188 = vand.u32 2147483647, %v124
    %v189 = vand.u32 2147483647, %v125
    %v190 = vand.u32 2147483647, %v126
    %v191 = vand.u32 2147483647, %v127
    %v192 = vand.u32 2147483647, %v128
    %v193 = vand.u32 2147483647, %v129
    %v194 = vand.u32 2147483647, %v130
    %v195 = vand.u32 2147483647, %v131
    %v196 = vand.u32 2147483647, %v132
    %v197 = vand.u32 2147483647, %v133
    %v198 = vand.u32 2147483647, %v134
    %v199 = vand.u32 2147483647, %v135
    %v200 = vand.u32 2147483647, %v136
    %v201 = vand.u32 2147483647, %v137
    %v202 = vand.u32 2147483647, %v138
    %v203 = vand.u32 2147483647, %v139
    %v204 = vand.u32 2147483647, %v140
    %v205 = vand.u32 2147483647, %v141
    %v206 = vand.u32 2147483647, %v142
    %v207 = vand.u32 2147483647, %v143
    %v208 = vand.u32 2147483647, %v144
    %v209 = vand.u32 2147483647, %v145
    %v210 = vand.u32 2147483647, %v146
    %v211 = vand.u32 2147483647, %v147
    %v212 = vand.u32 2147483647, %v148
    %v213 = vand.u32 2147483647, %v149
    %v214 = vand.u32 2147483647, %v150
    %v215 = vand.u32 2147483647, %v151
    %v216 = vlaneseq
    %v217 = vshrl.u32 %v216, 7
    %v218 = vsub.s32 0, %v217
    %v219 = vrot.slane %v72, %v218
    %v220 = vlaneseq
    %v221 = vshrl.u32 %v220, 7
    %v222 = vsub.s32 0, %v221
    %v223 = vrot.slane %v73, %v222
    %v224 = vlaneseq
    %v225 = vshrl.u32 %v224, 7
    %v226 = vsub.s32 0, %v225
    %v227 = vrot.slane %v74, %v226
    %v228 = vlaneseq
    %v229 = vshrl.u32 %v228, 7
    %v230 = vsub.s32 0, %v229
    %v231 = vrot.slane %v75, %v230
    %v232 = vlaneseq
    %v233 = vshrl.u32 %v232, 7
    %v234 = vsub.s32 0, %v233
    %v235 = vrot.slane %v76, %v234
    %v236 = vlaneseq
    %v237 = vshrl.u32 %v236, 7
    %v238 = vsub.s32 0, %v237
    %v239 = vrot.slane %v77, %v238
    %v240 = vlaneseq
    %v241 = vshrl.u32 %v240, 7
    %v242 = vsub.s32 0, %v241
    %v243 = vrot.slane %v78, %v242
    %v244 = vlaneseq
    %v245 = vshrl.u32 %v244, 7
    %v246 = vsub.s32 0, %v245
    %v247 = vrot.slane %v79, %v246
    %v248 = vlaneseq
    %v249 = vshrl.u32 %v248, 7
    %v250 = vsub.s32 0, %v249
    %v251 = vrot.slane %v80, %v250
    %v252 = vlaneseq
    %v253 = vshrl.u32 %v252, 7
    %v254 = vsub.s32 0, %v253
    %v255 = vrot.slane %v81, %v254
    %v256 = vlaneseq
    %v257 = vshrl.u32 %v256, 7
    %v258 = vsub.s32 0, %v257
    %v259 = vrot.slane %v82, %v258
    %v260 = vlaneseq
    %v261 = vshrl.u32 %v260, 7
    %v262 = vsub.s32 0, %v261
    %v263 = vrot.slane %v83, %v262
    %v264 = vlaneseq
    %v265 = vshrl.u32 %v264, 7
    %v266 = vsub.s32 0, %v265
    %v267 = vrot.slane %v84, %v266
    %v268 = vlaneseq
    %v269 = vshrl.u32 %v268, 7
    %v270 = vsub.s32 0, %v269
    %v271 = vrot.slane %v85, %v270
    %v272 = vlaneseq
    %v273 = vshrl.u32 %v272, 7
    %v274 = vsub.s32 0, %v273
    %v275 = vrot.slane %v86, %v274
    %v276 = vlaneseq
    %v277 = vshrl.u32 %v276, 7
    %v278 = vsub.s32 0, %v277
    %v279 = vrot.slane %v87, %v278
    %v280 = vadd.f32 %v219, %v152
    %v281 = vadd.f32 %v219, %v153
    %v282 = vadd.f32 %v219, %v154
    %v283 = vadd.f32 %v219, %v155
    %v284 = vadd.f32 %v223, %v156
    %v285 = vadd.f32 %v223, %v157
    %v286 = vadd.f32 %v223, %v158
    %v287 = vadd.f32 %v223, %v159
    %v288 = vadd.f32 %v227, %v160
    %v289 = vadd.f32 %v227, %v161
    %v290 = vadd.f32 %v227, %v162
    %v291 = vadd.f32 %v227, %v163
    %v292 = vadd.f32 %v231, %v164
    %v293 = vadd.f32 %v231, %v165
    %v294 = vadd.f32 %v231, %v166
    %v295 = vadd.f32 %v231, %v167
    %v296 = vadd.f32 %v235, %v168
    %v297 = vadd.f32 %v235, %v169
    %v298 = vadd.f32 %v235, %v170
    %v299 = vadd.f32 %v235, %v171
    %v300 = vadd.f32 %v239, %v172
    %v301 = vadd.f32 %v239, %v173
    %v302 = vadd.f32 %v239, %v174
    %v303 = vadd.f32 %v239, %v175
    %v304 = vadd.f32 %v243, %v176
    %v305 = vadd.f32 %v243, %v177
    %v306 = vadd.f32 %v243, %v178
    %v307 = vadd.f32 %v243, %v179
    %v308 = vadd.f32 %v247, %v180
    %v309 = vadd.f32 %v247, %v181
    %v310 = vadd.f32 %v247, %v182
    %v311 = vadd.f32 %v247, %v183
    %v312 = vadd.f32 %v251, %v184
    %v313 = vadd.f32 %v251, %v185
    %v314 = vadd.f32 %v251, %v186
    %v315 = vadd.f32 %v251, %v187
    %v316 = vadd.f32 %v255, %v188
    %v317 = vadd.f32 %v255, %v189
    %v318 = vadd.f32 %v255, %v190
    %v319 = vadd.f32 %v255, %v191
    %v320 = vadd.f32 %v259, %v192
    %v321 = vadd.f32 %v259, %v193
    %v322 = vadd.f32 %v259, %v194
    %v323 = vadd.f32 %v259, %v195
    %v324 = vadd.f32 %v263, %v196
    %v325 = vadd.f32 %v263, %v197
    %v326 = vadd.f32 %v263, %v198
    %v327 = vadd.f32 %v263, %v199
    %v328 = vadd.f32 %v267, %v200
    %v329 = vadd.f32 %v267, %v201
    %v330 = vadd.f32 %v267, %v202
    %v331 = vadd.f32 %v267, %v203
    %v332 = vadd.f32 %v271, %v204
    %v333 = vadd.f32 %v271, %v205
    %v334 = vadd.f32 %v271, %v206
    %v335 = vadd.f32 %v271, %v207
    %v336 = vadd.f32 %v275, %v208
    %v337 = vadd.f32 %v275, %v209
    %v338 = vadd.f32 %v275, %v210
    %v339 = vadd.f32 %v275, %v211
    %v340 = vadd.f32 %v279, %v212
    %v341 = vadd.f32 %v279, %v213
    %v342 = vadd.f32 %v279, %v214
    %v343 = vadd.f32 %v279, %v215
    %vm344 = vcmask 261120
    %345 = vst.msk [vmem:[#allocation7] sm:$0xff] %vm344, %v280
    %346 = vst.msk [vmem:[#allocation7 + $0x8] sm:$0xff] %vm344, %v281
    %347 = vst.msk [vmem:[#allocation7 + $0x10] sm:$0xff] %vm344, %v282
    %348 = vst.msk [vmem:[#allocation7 + $0x18] sm:$0xff] %vm344, %v283
    %349 = vst.msk [vmem:[#allocation7 + $0x20] sm:$0xff] %vm344, %v284
    %350 = vst.msk [vmem:[#allocation7 + $0x28] sm:$0xff] %vm344, %v285
    %351 = vst.msk [vmem:[#allocation7 + $0x30] sm:$0xff] %vm344, %v286
    %352 = vst.msk [vmem:[#allocation7 + $0x38] sm:$0xff] %vm344, %v287
    %353 = vst.msk [vmem:[#allocation7 + $0x40] sm:$0xff] %vm344, %v288
    %354 = vst.msk [vmem:[#allocation7 + $0x48] sm:$0xff] %vm344, %v289
    %355 = vst.msk [vmem:[#allocation7 + $0x50] sm:$0xff] %vm344, %v290
    %356 = vst.msk [vmem:[#allocation7 + $0x58] sm:$0xff] %vm344, %v291
    %357 = vst.msk [vmem:[#allocation7 + $0x60] sm:$0xff] %vm344, %v292
    %358 = vst.msk [vmem:[#allocation7 + $0x68] sm:$0xff] %vm344, %v293
    %359 = vst.msk [vmem:[#allocation7 + $0x70] sm:$0xff] %vm344, %v294
    %360 = vst.msk [vmem:[#allocation7 + $0x78] sm:$0xff] %vm344, %v295
    %361 = vst.msk [vmem:[#allocation7 + $0x80] sm:$0xff] %vm344, %v296
    %362 = vst.msk [vmem:[#allocation7 + $0x88] sm:$0xff] %vm344, %v297
    %363 = vst.msk [vmem:[#allocation7 + $0x90] sm:$0xff] %vm344, %v298
    %364 = vst.msk [vmem:[#allocation7 + $0x98] sm:$0xff] %vm344, %v299
    %365 = vst.msk [vmem:[#allocation7 + $0xa0] sm:$0xff] %vm344, %v300
    %366 = vst.msk [vmem:[#allocation7 + $0xa8] sm:$0xff] %vm344, %v301
    %367 = vst.msk [vmem:[#allocation7 + $0xb0] sm:$0xff] %vm344, %v302
    %368 = vst.msk [vmem:[#allocation7 + $0xb8] sm:$0xff] %vm344, %v303
    %369 = vst.msk [vmem:[#allocation7 + $0xc0] sm:$0xff] %vm344, %v304
    %370 = vst.msk [vmem:[#allocation7 + $0xc8] sm:$0xff] %vm344, %v305
    %371 = vst.msk [vmem:[#allocation7 + $0xd0] sm:$0xff] %vm344, %v306
    %372 = vst.msk [vmem:[#allocation7 + $0xd8] sm:$0xff] %vm344, %v307
    %373 = vst.msk [vmem:[#allocation7 + $0xe0] sm:$0xff] %vm344, %v308
    %374 = vst.msk [vmem:[#allocation7 + $0xe8] sm:$0xff] %vm344, %v309
    %375 = vst.msk [vmem:[#allocation7 + $0xf0] sm:$0xff] %vm344, %v310
    %376 = vst.msk [vmem:[#allocation7 + $0xf8] sm:$0xff] %vm344, %v311
    %377 = vst.msk [vmem:[#allocation7 + $0x100] sm:$0xff] %vm344, %v312
    %378 = vst.msk [vmem:[#allocation7 + $0x108] sm:$0xff] %vm344, %v313
    %379 = vst.msk [vmem:[#allocation7 + $0x110] sm:$0xff] %vm344, %v314
    %380 = vst.msk [vmem:[#allocation7 + $0x118] sm:$0xff] %vm344, %v315
    %381 = vst.msk [vmem:[#allocation7 + $0x120] sm:$0xff] %vm344, %v316
    %382 = vst.msk [vmem:[#allocation7 + $0x128] sm:$0xff] %vm344, %v317
    %383 = vst.msk [vmem:[#allocation7 + $0x130] sm:$0xff] %vm344, %v318
    %384 = vst.msk [vmem:[#allocation7 + $0x138] sm:$0xff] %vm344, %v319
    %385 = vst.msk [vmem:[#allocation7 + $0x140] sm:$0xff] %vm344, %v320
    %386 = vst.msk [vmem:[#allocation7 + $0x148] sm:$0xff] %vm344, %v321
    %387 = vst.msk [vmem:[#allocation7 + $0x150] sm:$0xff] %vm344, %v322
    %388 = vst.msk [vmem:[#allocation7 + $0x158] sm:$0xff] %vm344, %v323
    %389 = vst.msk [vmem:[#allocation7 + $0x160] sm:$0xff] %vm344, %v324
    %390 = vst.msk [vmem:[#allocation7 + $0x168] sm:$0xff] %vm344, %v325
    %391 = vst.msk [vmem:[#allocation7 + $0x170] sm:$0xff] %vm344, %v326
    %392 = vst.msk [vmem:[#allocation7 + $0x178] sm:$0xff] %vm344, %v327
    %393 = vst.msk [vmem:[#allocation7 + $0x180] sm:$0xff] %vm344, %v328
    %394 = vst.msk [vmem:[#allocation7 + $0x188] sm:$0xff] %vm344, %v329
    %395 = vst.msk [vmem:[#allocation7 + $0x190] sm:$0xff] %vm344, %v330
    %396 = vst.msk [vmem:[#allocation7 + $0x198] sm:$0xff] %vm344, %v331
    %397 = vst.msk [vmem:[#allocation7 + $0x1a0] sm:$0xff] %vm344, %v332
    %398 = vst.msk [vmem:[#allocation7 + $0x1a8] sm:$0xff] %vm344, %v333
    %399 = vst.msk [vmem:[#allocation7 + $0x1b0] sm:$0xff] %vm344, %v334
    %400 = vst.msk [vmem:[#allocation7 + $0x1b8] sm:$0xff] %vm344, %v335
    %401 = vst.msk [vmem:[#allocation7 + $0x1c0] sm:$0xff] %vm344, %v336
    %402 = vst.msk [vmem:[#allocation7 + $0x1c8] sm:$0xff] %vm344, %v337
    %403 = vst.msk [vmem:[#allocation7 + $0x1d0] sm:$0xff] %vm344, %v338
    %404 = vst.msk [vmem:[#allocation7 + $0x1d8] sm:$0xff] %vm344, %v339
    %405 = vst.msk [vmem:[#allocation7 + $0x1e0] sm:$0xff] %vm344, %v340
    %406 = vst.msk [vmem:[#allocation7 + $0x1e8] sm:$0xff] %vm344, %v341
    %407 = vst.msk [vmem:[#allocation7 + $0x1f0] sm:$0xff] %vm344, %v342
    %408 = vst.msk [vmem:[#allocation7 + $0x1f8] sm:$0xff] %vm344, %v343
    // Predicated region
    $region18: #{tpu_custom_call.1} parent=1 // pred_check
      _
    $region19: #{tpu_custom_call.1} parent=1 // pred_check_branch
      %410 = sbr.rel (0) target = $region21
    $region20: #{tpu_custom_call.1} parent=1 // pred_region
      %s412 = ssub.s32 8192, 8192
      %413 = vsyncadd [#allocation4], %s412
      %s414 = sshll.u32 [#allocation7], 4
      %s415 = int_to_ptr.vmem [resolvable:$true] %s414
      %420 = dma.vmem_to_hbm [thread:$0]  %s415, 8192, %s2, [#allocation4], 128, 128, 8
    $region21: #{tpu_custom_call.1} parent=1 // pred_fallthru
      _
    // Predicated region
    $region22: #{tpu_custom_call.1} parent=1 // pred_check
      _
    $region23: #{tpu_custom_call.1} parent=1 // pred_check_branch
      %422 = sbr.rel (0) target = $region25
    $region24: #{tpu_custom_call.1} parent=1 // pred_region
      %423 = dma.done [#allocation4], 8192
    $region25: #{tpu_custom_call.1} parent=1 // pred_fallthru
      _
    %424 = vsyncpa [#allocation3], 1
    %425 = vsyncpa [#allocation6], 1
    %426 = vsyncpa [#allocation4], 1

</llo_original>
